<compile_context>
chip_gen: v7x
topology: tpu7x:2x2x1
jax: 0.10.0
libtpu: 0.0.40
codegen_flags: <defaults>
</compile_context>

<pallas_src>
import jax
import jax.numpy as jnp
from jax.experimental import pallas as pl
from jax.experimental.pallas import tpu as pltpu


def _pointwise_conv_kernel(x_ref, w_ref, b_ref, o_ref):
    # x_ref: (C, TM)   w_ref: (O, C)   b_ref: (O, 1)   o_ref: (O, TM)
    acc = jnp.dot(w_ref[...], x_ref[...], preferred_element_type=jnp.float32)
    o_ref[...] = (acc + b_ref[...]).astype(o_ref.dtype)


def segmentor_forward(x, weight, bias, *, tm_max=2048):
    """Conv3d(kernel_size=1) forward, native NCDHW layout.

    Args:
      x:      (N, C, D, H, W)  float32
      weight: (O, C, 1, 1, 1)  float32  (PyTorch Conv3d layout)
      bias:   (O,)             float32
    Returns:
      (N, O, D, H, W) float32
    """
    N, C, D, H, W = x.shape
    O = weight.shape[0]
    DHW = D * H * W

    # Free reshapes only (no transpose, no pad).
    x3 = x.reshape(N, C, DHW)          # (N, C, DHW)
    w_mat = weight.reshape(O, C)       # (O, C)
    b_mat = bias.reshape(O, 1)         # (O, 1)

    # Spatial tile: multiple of 128 lanes when possible, else one full block.
    if DHW % 128 == 0:
        tm = min(tm_max, DHW)
        tm = max(128, (tm // 128) * 128)
    else:
        # TODO(synk): for very large DHW not divisible by 128, pad the spatial
        # axis instead of using one full-width block.
        tm = DHW

    grid = (N, pl.cdiv(DHW, tm))

    out3 = pl.pallas_call(
        _pointwise_conv_kernel,
        out_shape=jax.ShapeDtypeStruct((N, O, DHW), x.dtype),
        grid_spec=pltpu.PrefetchScalarGridSpec(
            num_scalar_prefetch=0,
            grid=grid,
            in_specs=[
                # batch dim squeezed out; spatial axis is the lane dim.
                pl.BlockSpec((None, C, tm), lambda n, t: (n, 0, t)),
                pl.BlockSpec((O, C), lambda n, t: (0, 0)),
                pl.BlockSpec((O, 1), lambda n, t: (0, 0)),
            ],
            out_specs=pl.BlockSpec((None, O, tm), lambda n, t: (n, 0, t)),
        ),
        compiler_params=pltpu.CompilerParams(
            dimension_semantics=("parallel", "parallel"),
        ),
    )(x3, w_mat, b_mat)

    return out3.reshape(N, O, D, H, W)


if __name__ == "__main__":
    key = jax.random.PRNGKey(0)
    k_x, k_w, k_b = jax.random.split(key, 3)

    N, C, Dd, Hh, Ww = 2, 4, 8, 8, 8      # small 3D volume
    num_classes = 3

    x = jax.random.normal(k_x, (N, C, Dd, Hh, Ww), dtype=jnp.float32)
    weight = jax.random.normal(k_w, (num_classes, C, 1, 1, 1), dtype=jnp.float32) * 0.1
    bias = jax.random.normal(k_b, (num_classes,), dtype=jnp.float32) * 0.1

    out = segmentor_forward(x, weight, bias)
    out = jax.block_until_ready(out)

    # reference: pointwise linear over channels in plain JAX
    ref = (
        jnp.einsum("ncdhw,oc->nodhw", x, weight.reshape(num_classes, C))
        + bias[None, :, None, None, None]
    )
    assert out.shape == (N, num_classes, Dd, Hh, Ww)
    assert jnp.allclose(out, ref, atol=1e-4), "mismatch vs reference"

    print("KERNEL_OK")
</pallas_src>

<mosaic_0001>
module attributes {stable_mosaic.version = 11 : i64} {
  func.func @_pointwise_conv_kernel(%arg0: i32, %arg1: i32, %arg2: memref<1x4x512xf32, #tpu.memory_space<vmem>>, %arg3: memref<3x4xf32, #tpu.memory_space<vmem>>, %arg4: memref<3x1xf32, #tpu.memory_space<vmem>>, %arg5: memref<1x3x512xf32, #tpu.memory_space<vmem>>) attributes {dimension_semantics = [#tpu.dimension_semantics<parallel>, #tpu.dimension_semantics<parallel>], iteration_bounds = array<i64: 2, 1>, scalar_prefetch = 0 : i64, scratch_operands = 0 : i64, tpu.core_type = #tpu.core_type<tc>, window_params = [{transform_indices = @transform_0, window_bounds = array<i64: 1, 4, 512>}, {pipeline_mode = #tpu.pipeline_mode<synchronous>, transform_indices = @transform_1, window_bounds = array<i64: 3, 4>}, {pipeline_mode = #tpu.pipeline_mode<synchronous>, transform_indices = @transform_2, window_bounds = array<i64: 3, 1>}, {transform_indices = @transform_3, window_bounds = array<i64: 1, 3, 512>}]} {
    %c0 = arith.constant 0 : index
    %c0_0 = arith.constant 0 : index
    %0 = vector.load %arg3[%c0, %c0_0] : memref<3x4xf32, #tpu.memory_space<vmem>>, vector<3x4xf32>
    %c0_1 = arith.constant 0 : index
    %c0_2 = arith.constant 0 : index
    %c0_3 = arith.constant 0 : index
    %1 = vector.load %arg2[%c0_1, %c0_2, %c0_3] : memref<1x4x512xf32, #tpu.memory_space<vmem>>, vector<1x4x512xf32>
    %2 = vector.shape_cast %1 : vector<1x4x512xf32> to vector<4x512xf32>
    %cst = arith.constant dense<0.000000e+00> : vector<3x512xf32>
    %3 = tpu.matmul %0, %2, %cst {dimension_numbers = #tpu.dot_dimension_numbers<[1], [0], [0], [1], [0, 0, 1, 1], [], []>} : vector<3x4xf32>, vector<4x512xf32>, vector<3x512xf32> -> vector<3x512xf32>
    %c0_4 = arith.constant 0 : index
    %c0_5 = arith.constant 0 : index
    %4 = vector.load %arg4[%c0_4, %c0_5] : memref<3x1xf32, #tpu.memory_space<vmem>>, vector<3x1xf32>
    %5 = vector.broadcast %4 : vector<3x1xf32> to vector<3x512xf32>
    %6 = arith.addf %3, %5 : vector<3x512xf32>
    %c0_6 = arith.constant 0 : index
    %c0_7 = arith.constant 0 : index
    %c0_8 = arith.constant 0 : index
    %7 = vector.load %arg5[%c0_6, %c0_7, %c0_8] : memref<1x3x512xf32, #tpu.memory_space<vmem>>, vector<1x3x512xf32>
    %8 = vector.shape_cast %7 : vector<1x3x512xf32> to vector<3x512xf32>
    %9 = vector.shape_cast %6 : vector<3x512xf32> to vector<1x3x512xf32>
    tpu.vector_store %arg5[%c0_6, %c0_7, %c0_8], %9 {strides = array<i32>} : memref<1x3x512xf32, #tpu.memory_space<vmem>>, vector<1x3x512xf32>,
    return
  }
  func.func @transform_0(%arg0: i32, %arg1: i32) -> (i32, i32, i32) {
    %c0_i32 = arith.constant 0 : i32
    %c0_i32_0 = arith.constant 0 : i32
    return %arg0, %c0_i32, %arg1 : i32, i32, i32
  }
  func.func @transform_1(%arg0: i32, %arg1: i32) -> (i32, i32) {
    %c0_i32 = arith.constant 0 : i32
    %c0_i32_0 = arith.constant 0 : i32
    %c0_i32_1 = arith.constant 0 : i32
    return %c0_i32, %c0_i32_0 : i32, i32
  }
  func.func @transform_2(%arg0: i32, %arg1: i32) -> (i32, i32) {
    %c0_i32 = arith.constant 0 : i32
    %c0_i32_0 = arith.constant 0 : i32
    %c0_i32_1 = arith.constant 0 : i32
    return %c0_i32, %c0_i32_0 : i32, i32
  }
  func.func @transform_3(%arg0: i32, %arg1: i32) -> (i32, i32, i32) {
    %c0_i32 = arith.constant 0 : i32
    %c0_i32_0 = arith.constant 0 : i32
    return %arg0, %c0_i32, %arg1 : i32, i32, i32
  }
}

</mosaic_0001>

<llo_original>
// kernel: tpu_custom_call.1
$region0: #{tpu_custom_call.1}
  #allocation0 [shape = 'u32[]', space=smem, size = 0x4, offset = 0x4, fixed_abs, tag = 'smem constant byte address 0x4 - core index']
  #allocation1 [shape = 'u32[144,128]{1,0:T(1,128)}', space=vmem, size = 0x12000, scoped, tag = 'internal scratch']
  %s0 = inlined_call_operand.hbm [shape: f32[2,4,512], index: 0, kind: input, shape index: {}]
  %s1 = inlined_call_operand.vmem [shape: f32[3,4], index: 1, kind: input, shape index: {}]
  %s2 = inlined_call_operand.vmem [shape: f32[3,1], index: 2, kind: input, shape index: {}]
  %s3 = inlined_call_operand.vmem [shape: f32[2,3,512], index: 3, kind: output, shape index: {}]
  %s4 = sld [smem:[#allocation0]]
  $region49: #{tpu_custom_call.1} parent=0
    _
  %s6 = ssub.s32 1, %s4
  %s7 = scalar_select 0, %s6, %s4
  $region1: #{tpu_custom_call.1} parent=0
    #allocation2 [shape = 'u8[16384]{0}', space=vmem, size = 0x4000, scoped, tag = 'input window, operand 0']
    #allocation3 [shape = 's32[2]{0}', space=sflag, size = 0x8, scoped, tag = 'scoped memory for tpu_custom_call.1']
    %8 = vsyncpa [#allocation3], 0
    %s9 = scalar_lea.sflag [#allocation3], 1
    %10 = vsyncpa %s9, 0
    loop: start=0, step=1, limit=4
    $region2: #{tpu_custom_call.1} parent=1 // loop_pre_header
      _
    $region3: #{tpu_custom_call.1} parent=1 // loop_header
      %s12 = sphi 0, %s16
      %p13 = scmp.ge.s32.totalorder %s12, 4
      %s19 = sphi 0, %s31
      %s20 = sphi 0, %s27
      %s21 = sphi 0, %s19
      %s22 = sphi 0, %s20
      %s23 = sphi 0, %s21
      %s24 = sphi 0, %s22
      %s36 = sphi 0, %s38
      %s39 = sphi 0, %s36
      %s40 = sphi 0, %s39
      %s56 = sphi 0, %s40
      %s60 = sphi 0, %s60
      %s62 = sphi 0, %s60
      %s63 = sphi 0, %s62
      %s77 = sphi 0, %s63
      %s81 = sphi 0, %s81
      %s83 = sphi 0, %s81
      %s84 = sphi 0, %s83
      %s98 = sphi 0, %s84
      %s106 = sphi 0, %s108
      %s109 = sphi 0, %s106
      %s110 = sphi 0, %s109
      %s126 = sphi 0, %s110
    $region4: #{tpu_custom_call.1} parent=1 // loop_header_branch
      %15 = sbr.rel (%p13) target = $region8
    $region5: #{tpu_custom_call.1} parent=1 // loop_body
      %s17 = ssub.s32 %s12, 1
      %s18 = ssub.s32 %s12, 2
      %s25 = sadd.s32 1, %s20
      %p26 = scmp.ge.s32.totalorder %s25, 1
      %s27 = scalar_select %p26, 0, %s25
      %s28 = sadd.s32 1, %s19
      %s29 = scalar_select %p26, %s28, %s19
      %p30 = scmp.ge.s32.totalorder %s29, 2
      %s31 = scalar_select %p30, 0, %s29
      %s32 = ssub.s32 %s19, %s31
      %s33 = ssub.s32 %s20, %s27
      %s34 = sor.u32 %s32, %s33
      %p35 = scmp.eq.s32.totalorder %s34, 0
      %s37 = sadd.s32 %s36, 1
      %s38 = scalar_select %p35, %s36, %s37
      %p41 = pneg %p35
      %p42 = scmp.eq.s32.totalorder %s12, 1
      %p43 = por %p41, %p42
      %p44 = scmp.ne.s32.totalorder %s36, %s39
      %p45 = scmp.eq.s32.totalorder %s12, 0
      %p46 = por %p44, %p45
      %p47 = scmp.ne.s32.totalorder %s36, %s39
      %p48 = scmp.eq.s32.totalorder %s17, 1
      %p49 = por %p47, %p48
      %p50 = scmp.ne.s32.totalorder %s39, %s40
      %p51 = scmp.eq.s32.totalorder %s17, 0
      %p52 = por %p50, %p51
      %p53 = scmp.ne.s32.totalorder %s39, %s40
      %p54 = scmp.eq.s32.totalorder %s18, 1
      %p55 = por %p53, %p54
      %p57 = scmp.ne.s32.totalorder %s40, %s56
      %p58 = scmp.eq.s32.totalorder %s18, 0
      %p59 = por %p57, %p58
      %s61 = sadd.s32 %s60, 1
      %p64 = scmp.eq.s32.totalorder %s12, 1
      %p65 = scmp.ne.s32.totalorder %s60, %s62
      %p66 = scmp.eq.s32.totalorder %s12, 0
      %p67 = por %p65, %p66
      %p68 = scmp.ne.s32.totalorder %s60, %s62
      %p69 = scmp.eq.s32.totalorder %s17, 1
      %p70 = por %p68, %p69
      %p71 = scmp.ne.s32.totalorder %s62, %s63
      %p72 = scmp.eq.s32.totalorder %s17, 0
      %p73 = por %p71, %p72
      %p74 = scmp.ne.s32.totalorder %s62, %s63
      %p75 = scmp.eq.s32.totalorder %s18, 1
      %p76 = por %p74, %p75
      %p78 = scmp.ne.s32.totalorder %s63, %s77
      %p79 = scmp.eq.s32.totalorder %s18, 0
      %p80 = por %p78, %p79
      %s82 = sadd.s32 %s81, 1
      %p85 = scmp.eq.s32.totalorder %s12, 1
      %p86 = scmp.ne.s32.totalorder %s81, %s83
      %p87 = scmp.eq.s32.totalorder %s12, 0
      %p88 = por %p86, %p87
      %p89 = scmp.ne.s32.totalorder %s81, %s83
      %p90 = scmp.eq.s32.totalorder %s17, 1
      %p91 = por %p89, %p90
      %p92 = scmp.ne.s32.totalorder %s83, %s84
      %p93 = scmp.eq.s32.totalorder %s17, 0
      %p94 = por %p92, %p93
      %p95 = scmp.ne.s32.totalorder %s83, %s84
      %p96 = scmp.eq.s32.totalorder %s18, 1
      %p97 = por %p95, %p96
      %p99 = scmp.ne.s32.totalorder %s84, %s98
      %p100 = scmp.eq.s32.totalorder %s18, 0
      %p101 = por %p99, %p100
      %s102 = ssub.s32 %s19, %s31
      %s103 = ssub.s32 %s20, %s27
      %s104 = sor.u32 %s102, %s103
      %p105 = scmp.eq.s32.totalorder %s104, 0
      %s107 = sadd.s32 %s106, 1
      %s108 = scalar_select %p105, %s106, %s107
      %p111 = pneg %p105
      %p112 = scmp.eq.s32.totalorder %s12, 1
      %p113 = por %p111, %p112
      %p114 = scmp.ne.s32.totalorder %s106, %s109
      %p115 = scmp.eq.s32.totalorder %s12, 0
      %p116 = por %p114, %p115
      %p117 = scmp.ne.s32.totalorder %s106, %s109
      %p118 = scmp.eq.s32.totalorder %s17, 1
      %p119 = por %p117, %p118
      %p120 = scmp.ne.s32.totalorder %s109, %s110
      %p121 = scmp.eq.s32.totalorder %s17, 0
      %p122 = por %p120, %p121
      %p123 = scmp.ne.s32.totalorder %s109, %s110
      %p124 = scmp.eq.s32.totalorder %s18, 1
      %p125 = por %p123, %p124
      %p127 = scmp.ne.s32.totalorder %s110, %s126
      %p128 = scmp.eq.s32.totalorder %s18, 0
      %p129 = por %p127, %p128
      %p130 = scmp.le.s32.totalorder 1, %s12
      %p131 = scmp.lt.s32.totalorder %s12, 3
      %p132 = pnand %p130, %p131
      %p133 = pneg %p132
      // Predicated region
      $region9: #{tpu_custom_call.1} parent=5 // pred_check
        _
      $region10: #{tpu_custom_call.1} parent=5 // pred_check_branch
        %135 = sbr.rel (%p132) target = $region12
      $region11: #{tpu_custom_call.1} parent=5 // pred_region
        %s136 = ssub.s32 %s12, 1
        // Predicated region
        $region13: #{tpu_custom_call.1} parent=11 // pred_check
          %p137 = pneg %p73
        $region14: #{tpu_custom_call.1} parent=11 // pred_check_branch
          %139 = sbr.rel (%p137) target = $region16
        $region15: #{tpu_custom_call.1} parent=11 // pred_region
          _
        $region16: #{tpu_custom_call.1} parent=11 // pred_fallthru
          _
        // Predicated region
        $region17: #{tpu_custom_call.1} parent=11 // pred_check
          %p140 = pneg %p94
        $region18: #{tpu_custom_call.1} parent=11 // pred_check_branch
          %142 = sbr.rel (%p140) target = $region20
        $region19: #{tpu_custom_call.1} parent=11 // pred_region
          _
        $region20: #{tpu_custom_call.1} parent=11 // pred_fallthru
          _
      $region12: #{tpu_custom_call.1} parent=5 // pred_fallthru
        _
      %p143 = scmp.lt.s32.totalorder %s12, 2
      // Predicated region
      $region21: #{tpu_custom_call.1} parent=5 // pred_check
        %p144 = pneg %p143
      $region22: #{tpu_custom_call.1} parent=5 // pred_check_branch
        %146 = sbr.rel (%p144) target = $region24
      $region23: #{tpu_custom_call.1} parent=5 // pred_region
        // Predicated region
        $region25: #{tpu_custom_call.1} parent=23 // pred_check
          %p147 = pneg %p46
        $region26: #{tpu_custom_call.1} parent=23 // pred_check_branch
          %149 = sbr.rel (%p147) target = $region28
        $region27: #{tpu_custom_call.1} parent=23 // pred_region
          %s150 = sand.u32 %s36, 1
          %s151 = scalar_lea.sflag [#allocation3], %s150
          %s152 = sand.u32 %s36, 1
          %s153 = smul.addr %s152, 16
          %s154 = scalar_lea.vmem [#allocation2], %s153
          %s155 = smul.u32 4, %s20
          %s157 = ssub.s32 256, 256
          %158 = vsyncadd %s151, %s157
          %s159 = smul.addr %s19, 4
          %s160 = sadd.s32 %s155, %s159
          %s161 = smul.addr %s160, 64
          %s162 = scalar_lea.hbm %s0, %s161
          %s164 = sshll.u32 %s154, 4
          %s165 = int_to_ptr.vmem [resolvable:$true] %s164
          %167 = dma.hbm_to_vmem [thread:$0]  %s162, 256, %s165, %s151
        $region28: #{tpu_custom_call.1} parent=23 // pred_fallthru
          _
      $region24: #{tpu_custom_call.1} parent=5 // pred_fallthru
        _
      %p168 = scmp.le.s32.totalorder 1, %s12
      %p169 = scmp.lt.s32.totalorder %s12, 3
      %p170 = pnand %p168, %p169
      %p171 = pneg %p170
      // Predicated region
      $region29: #{tpu_custom_call.1} parent=5 // pred_check
        _
      $region30: #{tpu_custom_call.1} parent=5 // pred_check_branch
        %173 = sbr.rel (%p170) target = $region32
      $region31: #{tpu_custom_call.1} parent=5 // pred_region
        %s174 = ssub.s32 %s12, 1
        %s175 = sand.u32 %s39, 1
        %s176 = scalar_lea.sflag [#allocation3], %s175
        %s177 = sand.u32 %s39, 1
        %s178 = smul.addr %s177, 16
        %s179 = scalar_lea.vmem [#allocation2], %s178
        // Predicated region
        $region33: #{tpu_custom_call.1} parent=31 // pred_check
          %p180 = pneg %p52
        $region34: #{tpu_custom_call.1} parent=31 // pred_check_branch
          %182 = sbr.rel (%p180) target = $region36
        $region35: #{tpu_custom_call.1} parent=31 // pred_region
          %183 = dma.done %s176, 256
        $region36: #{tpu_custom_call.1} parent=31 // pred_fallthru
          _
        %s184 = sand.u32 %s39, 1
        %s185 = scalar_lea.sflag [#allocation3], %s184
        %s186 = sand.u32 %s39, 1
        %s187 = smul.addr %s186, 16
        %s188 = scalar_lea.vmem [#allocation2], %s187
        %p189 = pneg %p52
        %p190 = pneg %p49
        %p191 = pneg %p73
        %p192 = pneg %p70
        %p193 = pneg %p94
        %p194 = pneg %p91
        %p195 = pneg %p122
        %p196 = pneg %p119
        %s197 = smul.u32 4, %s22
        %p198 = scmp.lt.s32.totalorder %s21, 1
        %s199 = scalar_select %p198, %s21, 1
        %p200 = scmp.lt.s32.totalorder %s197, 3
        %s201 = scalar_select %p200, %s197, 3
        %s202 = smul.addr %s199, 4
        %s203 = sadd.s32 %s201, %s202
        %s204 = smul.addr %s203, 4
        %s205 = scalar_lea.vmem %s3, %s204
        %s206 = smul.u32 4, %s22
        %s207 = smul.u32 4, %s22
        %p208 = scmp.lt.s32.totalorder %s21, 1
        %s209 = scalar_select %p208, %s21, 1
        %p210 = scmp.lt.s32.totalorder %s207, 3
        %s211 = scalar_select %p210, %s207, 3
        %s212 = smul.addr %s209, 4
        %s213 = sadd.s32 %s211, %s212
        %s214 = smul.addr %s213, 4
        %s215 = scalar_lea.vmem %s3, %s214
        %s216 = smul.u32 4, %s22
        %v217 = vld [vmem:[%s1] sm:$0x7]
        %v218 = vld [vmem:[%s179] sm:$0xff]
        %v219 = vld [vmem:[%s179 + $0x8] sm:$0xff]
        %v220 = vld [vmem:[%s2] sm:$0x7]
        %222 = vset.pattern.permute.xlu0 0
        %223 = vperm.xlu0 %222, %v220
        %v224 = vpop.permute.xlu0 %223
        %v228 = vcombine.high %v218, %v218
        %v229 = vcombine.high %v219, %v219
        %vm230 = vcmask 31744
        %v232 = vsel %vm230, %v217, 0
        %vm234 = vcmask 1043456
        %v235 = vsel %vm234, %v218, 0
        %v237 = vsel %vm234, %v228, 0
        %v239 = vsel %vm234, %v219, 0
        %v241 = vsel %vm234, %v229, 0
        %243 = vmatprep.subr.mxu0 %v237
        %244 = vmatpush1.msra.mxu0 %v235
        %245 = vmatprep.subr.mxu0 0.0
        %246 = vmatpush1.msra.mxu0 0.0
        %247 = vmatprep.subr.mxu0 0.0
        %248 = vmatpush1.msra.mxu0 0.0
        %249 = vmatprep.subr.mxu0 0.0
        %250 = vmatpush1.msra.mxu0 0.0
        %251 = vmatprep.subr.mxu0 0.0
        %252 = vmatpush1.msra.mxu0 0.0
        %253 = vmatprep.subr.mxu0 0.0
        %254 = vmatpush1.msra.mxu0 0.0
        %255 = vmatprep.subr.mxu0 0.0
        %256 = vmatpush1.msra.mxu0 0.0
        %257 = vmatprep.subr.mxu0 0.0
        %258 = vmatpush1.msra.mxu0 0.0
        %259 = vmatprep.subr.mxu0 0.0
        %260 = vmatpush1.msra.mxu0 0.0
        %261 = vmatprep.subr.mxu0 0.0
        %262 = vmatpush1.msra.mxu0 0.0
        %263 = vmatprep.subr.mxu0 0.0
        %264 = vmatpush1.msra.mxu0 0.0
        %265 = vmatprep.subr.mxu0 0.0
        %266 = vmatpush1.msra.mxu0 0.0
        %267 = vmatprep.subr.mxu0 0.0
        %268 = vmatpush1.msra.mxu0 0.0
        %269 = vmatprep.subr.mxu0 0.0
        %270 = vmatpush1.msra.mxu0 0.0
        %271 = vmatprep.subr.mxu0 0.0
        %272 = vmatpush1.msra.mxu0 0.0
        %273 = vmatprep.subr.mxu0 0.0
        %274 = vmatpush1.msra.mxu0 0.0
        %275 = vmatprep.subr.mxu0 0.0
        %276 = vmatpush1.msra.mxu0 0.0
        %277 = vmatprep.subr.mxu0 0.0
        %278 = vmatpush1.msra.mxu0 0.0
        %279 = vmatprep.subr.mxu0 0.0
        %280 = vmatpush1.msra.mxu0 0.0
        %281 = vmatprep.subr.mxu0 0.0
        %282 = vmatpush1.msra.mxu0 0.0
        %283 = vmatprep.subr.mxu0 0.0
        %284 = vmatpush1.msra.mxu0 0.0
        %285 = vmatprep.subr.mxu0 0.0
        %286 = vmatpush1.msra.mxu0 0.0
        %287 = vmatprep.subr.mxu0 0.0
        %288 = vmatpush1.msra.mxu0 0.0
        %289 = vmatprep.subr.mxu0 0.0
        %290 = vmatpush1.msra.mxu0 0.0
        %291 = vmatprep.subr.mxu0 0.0
        %292 = vmatpush1.msra.mxu0 0.0
        %293 = vmatprep.subr.mxu0 0.0
        %294 = vmatpush1.msra.mxu0 0.0
        %295 = vmatprep.subr.mxu0 0.0
        %296 = vmatpush1.msra.mxu0 0.0
        %297 = vmatprep.subr.mxu0 0.0
        %298 = vmatpush1.msra.mxu0 0.0
        %299 = vmatprep.subr.mxu0 0.0
        %300 = vmatpush1.msra.mxu0 0.0
        %301 = vmatprep.subr.mxu0 0.0
        %302 = vmatpush1.msra.mxu0 0.0
        %303 = vmatprep.subr.mxu0 0.0
        %304 = vmatpush1.msra.mxu0 0.0
        %305 = vmatprep.subr.mxu0 0.0
        %306 = vmatpush1.msra.mxu0 0.0
        %307 = vmatprep.mubr.f32.mxu0 0.0
        %308 = vmatmul.mubr.f32.gmra.mrb[0].mxu0 %v232
        %v309 = vpop.f32.mrb[0].mxu0
        %v310 = vadd.f32 %v224, %v309
        %v311 = vpop.f32.mrb[0].mxu0
        %v312 = vadd.f32 %v224, %v311
        %313 = vdwg.mxu0
        %314 = vmatprep.subr.mxu0 %v241
        %315 = vmatpush1.msra.mxu0 %v239
        %316 = vmatprep.subr.mxu0 0.0
        %317 = vmatpush1.msra.mxu0 0.0
        %318 = vmatprep.subr.mxu0 0.0
        %319 = vmatpush1.msra.mxu0 0.0
        %320 = vmatprep.subr.mxu0 0.0
        %321 = vmatpush1.msra.mxu0 0.0
        %322 = vmatprep.subr.mxu0 0.0
        %323 = vmatpush1.msra.mxu0 0.0
        %324 = vmatprep.subr.mxu0 0.0
        %325 = vmatpush1.msra.mxu0 0.0
        %326 = vmatprep.subr.mxu0 0.0
        %327 = vmatpush1.msra.mxu0 0.0
        %328 = vmatprep.subr.mxu0 0.0
        %329 = vmatpush1.msra.mxu0 0.0
        %330 = vmatprep.subr.mxu0 0.0
        %331 = vmatpush1.msra.mxu0 0.0
        %332 = vmatprep.subr.mxu0 0.0
        %333 = vmatpush1.msra.mxu0 0.0
        %334 = vmatprep.subr.mxu0 0.0
        %335 = vmatpush1.msra.mxu0 0.0
        %336 = vmatprep.subr.mxu0 0.0
        %337 = vmatpush1.msra.mxu0 0.0
        %338 = vmatprep.subr.mxu0 0.0
        %339 = vmatpush1.msra.mxu0 0.0
        %340 = vmatprep.subr.mxu0 0.0
        %341 = vmatpush1.msra.mxu0 0.0
        %342 = vmatprep.subr.mxu0 0.0
        %343 = vmatpush1.msra.mxu0 0.0
        %344 = vmatprep.subr.mxu0 0.0
        %345 = vmatpush1.msra.mxu0 0.0
        %346 = vmatprep.subr.mxu0 0.0
        %347 = vmatpush1.msra.mxu0 0.0
        %348 = vmatprep.subr.mxu0 0.0
        %349 = vmatpush1.msra.mxu0 0.0
        %350 = vmatprep.subr.mxu0 0.0
        %351 = vmatpush1.msra.mxu0 0.0
        %352 = vmatprep.subr.mxu0 0.0
        %353 = vmatpush1.msra.mxu0 0.0
        %354 = vmatprep.subr.mxu0 0.0
        %355 = vmatpush1.msra.mxu0 0.0
        %356 = vmatprep.subr.mxu0 0.0
        %357 = vmatpush1.msra.mxu0 0.0
        %358 = vmatprep.subr.mxu0 0.0
        %359 = vmatpush1.msra.mxu0 0.0
        %360 = vmatprep.subr.mxu0 0.0
        %361 = vmatpush1.msra.mxu0 0.0
        %362 = vmatprep.subr.mxu0 0.0
        %363 = vmatpush1.msra.mxu0 0.0
        %364 = vmatprep.subr.mxu0 0.0
        %365 = vmatpush1.msra.mxu0 0.0
        %366 = vmatprep.subr.mxu0 0.0
        %367 = vmatpush1.msra.mxu0 0.0
        %368 = vmatprep.subr.mxu0 0.0
        %369 = vmatpush1.msra.mxu0 0.0
        %370 = vmatprep.subr.mxu0 0.0
        %371 = vmatpush1.msra.mxu0 0.0
        %372 = vmatprep.subr.mxu0 0.0
        %373 = vmatpush1.msra.mxu0 0.0
        %374 = vmatprep.subr.mxu0 0.0
        %375 = vmatpush1.msra.mxu0 0.0
        %376 = vmatprep.subr.mxu0 0.0
        %377 = vmatpush1.msra.mxu0 0.0
        %378 = vmatprep.mubr.f32.mxu0 0.0
        %379 = vmatmul.mubr.f32.gmra.mrb[0].mxu0 %v232
        %v380 = vpop.f32.mrb[0].mxu0
        %v381 = vadd.f32 %v224, %v380
        %v382 = vpop.f32.mrb[0].mxu0
        %v383 = vadd.f32 %v224, %v382
        %384 = vdwg.mxu0
        %v389 = vcombine.low %v310, %v312
        %v390 = vcombine.low %v381, %v383
        %393 = vst [vmem:[%s215] sm:$0x77] %v389
        %394 = vst [vmem:[%s215 + $0x8] sm:$0x77] %v390
        %s395 = smul.u32 4, %s22
        %p396 = scmp.lt.s32.totalorder %s21, 1
        %s397 = scalar_select %p396, %s21, 1
        %p398 = scmp.lt.s32.totalorder %s395, 3
        %s399 = scalar_select %p398, %s395, 3
        %s400 = smul.addr %s397, 4
        %s401 = sadd.s32 %s399, %s400
        %s402 = smul.addr %s401, 4
        %s403 = scalar_lea.vmem %s3, %s402
        // Predicated region
        $region37: #{tpu_custom_call.1} parent=31 // pred_check
          %p404 = pneg %p119
        $region38: #{tpu_custom_call.1} parent=31 // pred_check_branch
          %406 = sbr.rel (%p404) target = $region40
        $region39: #{tpu_custom_call.1} parent=31 // pred_region
          %s407 = smul.u32 4, %s22
        $region40: #{tpu_custom_call.1} parent=31 // pred_fallthru
          _
      $region32: #{tpu_custom_call.1} parent=5 // pred_fallthru
        _
      %p408 = scmp.le.s32.totalorder 2, %s12
      // Predicated region
      $region41: #{tpu_custom_call.1} parent=5 // pred_check
        %p409 = pneg %p408
      $region42: #{tpu_custom_call.1} parent=5 // pred_check_branch
        %411 = sbr.rel (%p409) target = $region44
      $region43: #{tpu_custom_call.1} parent=5 // pred_region
        %s412 = ssub.s32 %s12, 2
        // Predicated region
        $region45: #{tpu_custom_call.1} parent=43 // pred_check
          %p413 = pneg %p125
        $region46: #{tpu_custom_call.1} parent=43 // pred_check_branch
          %415 = sbr.rel (%p413) target = $region48
        $region47: #{tpu_custom_call.1} parent=43 // pred_region
          %s416 = smul.u32 4, %s24
          %p417 = scmp.lt.s32.totalorder %s23, 1
          %s418 = scalar_select %p417, %s23, 1
          %p419 = scmp.lt.s32.totalorder %s416, 3
          %s420 = scalar_select %p419, %s416, 3
          %s421 = smul.addr %s418, 4
          %s422 = sadd.s32 %s420, %s421
          %s423 = smul.addr %s422, 4
          %s424 = scalar_lea.vmem %s3, %s423
        $region48: #{tpu_custom_call.1} parent=43 // pred_fallthru
          _
      $region44: #{tpu_custom_call.1} parent=5 // pred_fallthru
        _
    $region6: #{tpu_custom_call.1} parent=1 // loop_footer
      %s16 = sadd.s32 1, %s12
    $region7: #{tpu_custom_call.1} parent=1 // loop_footer_branch
      %11 = sbr.rel target = $region3
    $region8: #{tpu_custom_call.1} parent=1 // loop_exit
      _
    %425 = vsyncpa [#allocation3], 1
    %s426 = scalar_lea.sflag [#allocation3], 1
    %427 = vsyncpa %s426, 1

</llo_original>
